<compile_context>
chip_gen: v7x
topology: tpu7x:2x2x1
jax: 0.10.0
libtpu: 0.0.40
codegen_flags: <defaults>
</compile_context>

<pallas_src>
import jax
import jax.numpy as jnp
from jax import lax
from jax.experimental import pallas as pl
from jax.experimental.pallas import tpu as pltpu

FEATURE_SIZE = 32   # "feature_size" is a free symbol in the reference; fixed here
H1, H2, OUT = 20, 5, 1


def ann_kernel(x_ref, w1_ref, b1_ref, w2_ref, b2_ref, w3_ref, b3_ref, o_ref):
    # x_ref: (tb, F) f32 in native layout. Contract over F against w1 (H1, F)
    # -> (H1, tb): batch moves onto the lane axis for all downstream layers.
    x = x_ref[...]

    h1 = lax.dot_general(w1_ref[...], x, (((1,), (1,)), ((), ())),
                         preferred_element_type=jnp.float32)            # (H1, tb)
    h1 = jnp.maximum(h1 + b1_ref[...], 0.0)

    h2 = jnp.dot(w2_ref[...], h1, preferred_element_type=jnp.float32)   # (H2, tb)
    h2 = jnp.maximum(h2 + b2_ref[...], 0.0)

    z = jnp.dot(w3_ref[...], h2, preferred_element_type=jnp.float32)    # (1, tb)
    z = z + b3_ref[...]

    # Numerically stable sigmoid on the EUP (tanh); lane-dense (1, tb) store.
    o_ref[...] = 0.5 * (jnp.tanh(0.5 * z) + 1.0)


def _round_up(n, m):
    return ((n + m - 1) // m) * m


def _pick_tile(batch, cap=32768):
    """Lane-aligned (multiple of 128) batch tile.

    Prefer an even grid (>= 2 steps, both TensorCores on v7x) and big tiles so
    per-step DMA dwarfs the ~0.35us pipeline overhead, while bounding padding
    waste: tb = round_up(ceil(B/k), 128) for the smallest even k with tb <= cap.
    """
    if batch <= 256:
        return 128
    k = 2
    while _round_up(pl.cdiv(batch, k), 128) > cap:
        k += 2
    return _round_up(pl.cdiv(batch, k), 128)


def ann_forward(x, params, *, tb=None):
    """x: (B, F) float32. params: PyTorch-layout weights. Returns (B, 1) float32."""
    B, F = x.shape
    if tb is None:
        tb = _pick_tile(B)
    n_blocks = pl.cdiv(B, tb)
    B_pad = n_blocks * tb
    if B_pad != B:
        # Only the ragged remainder case pays a pad; the common tiled case is a no-op.
        x = jnp.pad(x, ((0, B_pad - B), (0, 0)))

    w1, b1 = params["w1"], params["b1"]   # (H1, F), (H1, 1) f32
    w2, b2 = params["w2"], params["b2"]   # (H2, H1), (H2, 1) f32
    w3, b3 = params["w3"], params["b3"]   # (OUT, H2), (OUT, 1) f32

    def full(a):
        # Constant-index full block: VMEM-resident across the whole grid.
        return pl.BlockSpec(a.shape, lambda i: (0, 0))

    flops = 2 * B_pad * (F * H1 + H1 * H2 + H2 * OUT)
    bytes_accessed = (
        B_pad * F * 4                      # x read (native f32, single pass)
        + B_pad * OUT * 4                  # output writeback
        + sum(a.size * a.dtype.itemsize for a in (w1, b1, w2, b2, w3, b3))
    )

    out = pl.pallas_call(
        ann_kernel,
        out_shape=jax.ShapeDtypeStruct((OUT, B_pad), jnp.float32),
        grid_spec=pltpu.PrefetchScalarGridSpec(
            num_scalar_prefetch=0,
            grid=(n_blocks,),
            in_specs=[
                pl.BlockSpec((tb, F), lambda i: (i, 0)),   # x in native (B, F) layout
                full(w1), full(b1),
                full(w2), full(b2),
                full(w3), full(b3),
            ],
            out_specs=pl.BlockSpec((OUT, tb), lambda i: (0, i)),  # lane-dense store
        ),
        compiler_params=pltpu.CompilerParams(
            dimension_semantics=("parallel",),
        ),
        cost_estimate=pl.CostEstimate(
            flops=flops,
            transcendentals=B_pad,
            bytes_accessed=bytes_accessed,
        ),
    )(x, w1, b1, w2, b2, w3, b3)

    # Back to PyTorch's (B, 1) layout; drop batch padding (tiny copy: 4 bytes/row).
    return out[0, :B][:, None]


def init_params(key, feature_size=FEATURE_SIZE):
    """PyTorch-default-like init (uniform +/- 1/sqrt(fan_in)).
    Weights stored PyTorch-style (out, in); biases as (out, 1) columns."""
    def linear(key, fan_in, fan_out):
        kw, kb = jax.random.split(key)
        bound = 1.0 / jnp.sqrt(fan_in)
        w = jax.random.uniform(kw, (fan_out, fan_in), jnp.float32, -bound, bound)
        b = jax.random.uniform(kb, (fan_out, 1), jnp.float32, -bound, bound)
        return w, b

    k1, k2, k3 = jax.random.split(key, 3)
    w1, b1 = linear(k1, feature_size, H1)
    w2, b2 = linear(k2, H1, H2)
    w3, b3 = linear(k3, H2, OUT)
    return dict(w1=w1, b1=b1, w2=w2, b2=b2, w3=w3, b3=b3)


def ann_reference(x, p):
    h1 = jnp.maximum(x @ p["w1"].T + p["b1"].T, 0.0)
    h2 = jnp.maximum(h1 @ p["w2"].T + p["b2"].T, 0.0)
    return jax.nn.sigmoid(h2 @ p["w3"].T + p["b3"].T)


if __name__ == "__main__":
    key = jax.random.PRNGKey(0)
    kx, kp = jax.random.split(key)

    batch = 256   # small demo batch; wrapper tiles any B (tb=128 -> 2 grid steps)
    x = jax.random.normal(kx, (batch, FEATURE_SIZE), jnp.float32)
    params = init_params(kp)

    out = jax.block_until_ready(ann_forward(x, params))
    ref = ann_reference(x, params)

    assert out.shape == (batch, 1)
    # All-f32 path; tolerance covers MXU default-precision matmul passes.
    assert jnp.allclose(out, ref, atol=2e-2), "mismatch vs reference"

    print("KERNEL_OK")
</pallas_src>

<mosaic_0001>
module attributes {stable_mosaic.version = 11 : i64} {
  func.func @ann_kernel(%arg0: i32, %arg1: memref<128x32xf32, #tpu.memory_space<vmem>>, %arg2: memref<20x32xf32, #tpu.memory_space<vmem>>, %arg3: memref<20x1xf32, #tpu.memory_space<vmem>>, %arg4: memref<5x20xf32, #tpu.memory_space<vmem>>, %arg5: memref<5x1xf32, #tpu.memory_space<vmem>>, %arg6: memref<1x5xf32, #tpu.memory_space<vmem>>, %arg7: memref<1x1xf32, #tpu.memory_space<vmem>>, %arg8: memref<1x128xf32, #tpu.memory_space<vmem>>) attributes {dimension_semantics = [#tpu.dimension_semantics<parallel>], iteration_bounds = array<i64: 2>, scalar_prefetch = 0 : i64, scratch_operands = 0 : i64, tpu.core_type = #tpu.core_type<tc>, window_params = [{transform_indices = @transform_0, window_bounds = array<i64: 128, 32>}, {pipeline_mode = #tpu.pipeline_mode<synchronous>, transform_indices = @transform_1, window_bounds = array<i64: 20, 32>}, {pipeline_mode = #tpu.pipeline_mode<synchronous>, transform_indices = @transform_2, window_bounds = array<i64: 20, 1>}, {pipeline_mode = #tpu.pipeline_mode<synchronous>, transform_indices = @transform_3, window_bounds = array<i64: 5, 20>}, {pipeline_mode = #tpu.pipeline_mode<synchronous>, transform_indices = @transform_4, window_bounds = array<i64: 5, 1>}, {pipeline_mode = #tpu.pipeline_mode<synchronous>, transform_indices = @transform_5, window_bounds = array<i64: 1, 5>}, {pipeline_mode = #tpu.pipeline_mode<synchronous>, transform_indices = @transform_6, window_bounds = array<i64: 1, 1>}, {transform_indices = @transform_7, window_bounds = array<i64: 1, 128>}]} {
    %c0 = arith.constant 0 : index
    %c0_0 = arith.constant 0 : index
    %0 = vector.load %arg1[%c0, %c0_0] : memref<128x32xf32, #tpu.memory_space<vmem>>, vector<128x32xf32>
    %c0_1 = arith.constant 0 : index
    %c0_2 = arith.constant 0 : index
    %1 = vector.load %arg2[%c0_1, %c0_2] : memref<20x32xf32, #tpu.memory_space<vmem>>, vector<20x32xf32>
    %cst = arith.constant dense<0.000000e+00> : vector<20x128xf32>
    %2 = tpu.matmul %1, %0, %cst {dimension_numbers = #tpu.dot_dimension_numbers<[1], [1], [0], [0], [0, 0, 1, 0], [], []>} : vector<20x32xf32>, vector<128x32xf32>, vector<20x128xf32> -> vector<20x128xf32>
    %c0_3 = arith.constant 0 : index
    %c0_4 = arith.constant 0 : index
    %3 = vector.load %arg3[%c0_3, %c0_4] : memref<20x1xf32, #tpu.memory_space<vmem>>, vector<20x1xf32>
    %4 = vector.broadcast %3 : vector<20x1xf32> to vector<20x128xf32>
    %5 = arith.addf %2, %4 : vector<20x128xf32>
    %cst_5 = arith.constant 0.000000e+00 : f32
    %6 = vector.broadcast %cst_5 : f32 to vector<20x128xf32>
    %7 = arith.maximumf %5, %6 : vector<20x128xf32>
    %c0_6 = arith.constant 0 : index
    %c0_7 = arith.constant 0 : index
    %8 = vector.load %arg4[%c0_6, %c0_7] : memref<5x20xf32, #tpu.memory_space<vmem>>, vector<5x20xf32>
    %cst_8 = arith.constant dense<0.000000e+00> : vector<5x128xf32>
    %9 = tpu.matmul %8, %7, %cst_8 {dimension_numbers = #tpu.dot_dimension_numbers<[1], [0], [0], [1], [0, 0, 1, 1], [], []>} : vector<5x20xf32>, vector<20x128xf32>, vector<5x128xf32> -> vector<5x128xf32>
    %c0_9 = arith.constant 0 : index
    %c0_10 = arith.constant 0 : index
    %10 = vector.load %arg5[%c0_9, %c0_10] : memref<5x1xf32, #tpu.memory_space<vmem>>, vector<5x1xf32>
    %11 = vector.broadcast %10 : vector<5x1xf32> to vector<5x128xf32>
    %12 = arith.addf %9, %11 : vector<5x128xf32>
    %cst_11 = arith.constant 0.000000e+00 : f32
    %13 = vector.broadcast %cst_11 : f32 to vector<5x128xf32>
    %14 = arith.maximumf %12, %13 : vector<5x128xf32>
    %c0_12 = arith.constant 0 : index
    %c0_13 = arith.constant 0 : index
    %15 = vector.load %arg6[%c0_12, %c0_13] : memref<1x5xf32, #tpu.memory_space<vmem>>, vector<1x5xf32>
    %cst_14 = arith.constant dense<0.000000e+00> : vector<1x128xf32>
    %16 = tpu.matmul %15, %14, %cst_14 {dimension_numbers = #tpu.dot_dimension_numbers<[1], [0], [0], [1], [0, 0, 1, 1], [], []>} : vector<1x5xf32>, vector<5x128xf32>, vector<1x128xf32> -> vector<1x128xf32>
    %c0_15 = arith.constant 0 : index
    %c0_16 = arith.constant 0 : index
    %17 = vector.load %arg7[%c0_15, %c0_16] : memref<1x1xf32, #tpu.memory_space<vmem>>, vector<1x1xf32>
    %18 = vector.broadcast %17 : vector<1x1xf32> to vector<1x128xf32>
    %19 = arith.addf %16, %18 : vector<1x128xf32>
    %cst_17 = arith.constant 5.000000e-01 : f32
    %20 = vector.broadcast %cst_17 : f32 to vector<1x128xf32>
    %21 = arith.mulf %20, %19 : vector<1x128xf32>
    %22 = math.tanh %21 : vector<1x128xf32>
    %cst_18 = arith.constant 1.000000e+00 : f32
    %23 = vector.broadcast %cst_18 : f32 to vector<1x128xf32>
    %24 = arith.addf %22, %23 : vector<1x128xf32>
    %cst_19 = arith.constant 5.000000e-01 : f32
    %25 = vector.broadcast %cst_19 : f32 to vector<1x128xf32>
    %26 = arith.mulf %25, %24 : vector<1x128xf32>
    %c0_20 = arith.constant 0 : index
    %c0_21 = arith.constant 0 : index
    %27 = vector.load %arg8[%c0_20, %c0_21] : memref<1x128xf32, #tpu.memory_space<vmem>>, vector<1x128xf32>
    tpu.vector_store %arg8[%c0_20, %c0_21], %26 {strides = array<i32>} : memref<1x128xf32, #tpu.memory_space<vmem>>, vector<1x128xf32>,
    return
  }
  func.func @transform_0(%arg0: i32) -> (i32, i32) {
    %c0_i32 = arith.constant 0 : i32
    %c0_i32_0 = arith.constant 0 : i32
    return %arg0, %c0_i32 : i32, i32
  }
  func.func @transform_1(%arg0: i32) -> (i32, i32) {
    %c0_i32 = arith.constant 0 : i32
    %c0_i32_0 = arith.constant 0 : i32
    %c0_i32_1 = arith.constant 0 : i32
    return %c0_i32, %c0_i32_0 : i32, i32
  }
  func.func @transform_2(%arg0: i32) -> (i32, i32) {
    %c0_i32 = arith.constant 0 : i32
    %c0_i32_0 = arith.constant 0 : i32
    %c0_i32_1 = arith.constant 0 : i32
    return %c0_i32, %c0_i32_0 : i32, i32
  }
  func.func @transform_3(%arg0: i32) -> (i32, i32) {
    %c0_i32 = arith.constant 0 : i32
    %c0_i32_0 = arith.constant 0 : i32
    %c0_i32_1 = arith.constant 0 : i32
    return %c0_i32, %c0_i32_0 : i32, i32
  }
  func.func @transform_4(%arg0: i32) -> (i32, i32) {
    %c0_i32 = arith.constant 0 : i32
    %c0_i32_0 = arith.constant 0 : i32
    %c0_i32_1 = arith.constant 0 : i32
    return %c0_i32, %c0_i32_0 : i32, i32
  }
  func.func @transform_5(%arg0: i32) -> (i32, i32) {
    %c0_i32 = arith.constant 0 : i32
    %c0_i32_0 = arith.constant 0 : i32
    %c0_i32_1 = arith.constant 0 : i32
    return %c0_i32, %c0_i32_0 : i32, i32
  }
  func.func @transform_6(%arg0: i32) -> (i32, i32) {
    %c0_i32 = arith.constant 0 : i32
    %c0_i32_0 = arith.constant 0 : i32
    %c0_i32_1 = arith.constant 0 : i32
    return %c0_i32, %c0_i32_0 : i32, i32
  }
  func.func @transform_7(%arg0: i32) -> (i32, i32) {
    %c0_i32 = arith.constant 0 : i32
    %c0_i32_0 = arith.constant 0 : i32
    return %c0_i32, %arg0 : i32, i32
  }
}

</mosaic_0001>

<llo_original>
// kernel: tpu_custom_call.1
$region0: #{tpu_custom_call.1}
  #allocation0 [shape = 'u32[]', space=smem, size = 0x4, offset = 0x4, fixed_abs, tag = 'smem constant byte address 0x4 - core index']
  #allocation1 [shape = 'u32[144,128]{1,0:T(1,128)}', space=vmem, size = 0x12000, scoped, tag = 'internal scratch']
  #allocation2 [shape = 'f32[1,1]{1,0:T(1,128)S(1)}', space=vmem, size = 0x200, scoped, tag = 'scoped memory for tpu_custom_call.1']
  %s0 = inlined_call_operand.vmem [shape: f32[256,32], index: 0, kind: input, shape index: {}]
  %s1 = inlined_call_operand.vmem [shape: f32[20,32], index: 1, kind: input, shape index: {}]
  %s2 = inlined_call_operand.vmem [shape: f32[20,1], index: 2, kind: input, shape index: {}]
  %s3 = inlined_call_operand.vmem [shape: f32[5,20], index: 3, kind: input, shape index: {}]
  %s4 = inlined_call_operand.vmem [shape: f32[5,1], index: 4, kind: input, shape index: {}]
  %s5 = inlined_call_operand.vmem [shape: f32[1,5], index: 5, kind: input, shape index: {}]
  %s6 = inlined_call_operand.<no memory space> [shape: f32[1,1], index: 6, kind: input, shape index: {}]
  %s7 = inlined_call_operand.hbm [shape: f32[1,256], index: 7, kind: output, shape index: {}]
  %s8 = sld [smem:[#allocation0]]
  $region61: #{tpu_custom_call.1} parent=0
    _
  %s10 = ssub.s32 1, %s8
  %s11 = scalar_select 0, %s10, %s8
  %v12 = vstv %s6
  %13 = vst [vmem:[#allocation2] sm:$0x1] %v12
  $region1: #{tpu_custom_call.1} parent=0
    #allocation3 [shape = 'u8[1024]{0}', space=vmem, size = 0x400, scoped, tag = 'output window, operand 0']
    #allocation4 [shape = 's32[2]{0}', space=sflag, size = 0x8, scoped, tag = 'scoped memory for tpu_custom_call.1']
    %14 = vsyncpa [#allocation4], 0
    %s15 = scalar_lea.sflag [#allocation4], 1
    %16 = vsyncpa %s15, 0
    loop: start=0, step=1, limit=4
    $region2: #{tpu_custom_call.1} parent=1 // loop_pre_header
      _
    $region3: #{tpu_custom_call.1} parent=1 // loop_header
      %s18 = sphi 0, %s22
      %p19 = scmp.ge.s32.totalorder %s18, 4
      %s28 = sphi 0, %s30
      %s31 = sphi 0, %s28
      %s32 = sphi 0, %s31
      %s48 = sphi 0, %s32
      %s52 = sphi 0, %s52
      %s54 = sphi 0, %s52
      %s55 = sphi 0, %s54
      %s69 = sphi 0, %s55
      %s73 = sphi 0, %s73
      %s75 = sphi 0, %s73
      %s76 = sphi 0, %s75
      %s90 = sphi 0, %s76
      %s94 = sphi 0, %s94
      %s96 = sphi 0, %s94
      %s97 = sphi 0, %s96
      %s111 = sphi 0, %s97
      %s115 = sphi 0, %s115
      %s117 = sphi 0, %s115
      %s118 = sphi 0, %s117
      %s132 = sphi 0, %s118
      %s136 = sphi 0, %s136
      %s138 = sphi 0, %s136
      %s139 = sphi 0, %s138
      %s153 = sphi 0, %s139
      %s157 = sphi 0, %s157
      %s159 = sphi 0, %s157
      %s160 = sphi 0, %s159
      %s174 = sphi 0, %s160
      %s180 = sphi 0, %s182
      %s183 = sphi 0, %s180
      %s184 = sphi 0, %s183
      %s200 = sphi 0, %s184
    $region4: #{tpu_custom_call.1} parent=1 // loop_header_branch
      %21 = sbr.rel (%p19) target = $region8
    $region5: #{tpu_custom_call.1} parent=1 // loop_body
      %s23 = ssub.s32 %s18, 1
      %s24 = ssub.s32 %s18, 2
      %s25 = sadd.s32 %s18, 1
      %s26 = ssub.s32 %s18, %s25
      %p27 = scmp.eq.s32.totalorder %s26, 0
      %s29 = sadd.s32 %s28, 1
      %s30 = scalar_select %p27, %s28, %s29
      %p33 = pneg %p27
      %p34 = scmp.eq.s32.totalorder %s18, 1
      %p35 = por %p33, %p34
      %p36 = scmp.ne.s32.totalorder %s28, %s31
      %p37 = scmp.eq.s32.totalorder %s18, 0
      %p38 = por %p36, %p37
      %p39 = scmp.ne.s32.totalorder %s28, %s31
      %p40 = scmp.eq.s32.totalorder %s23, 1
      %p41 = por %p39, %p40
      %p42 = scmp.ne.s32.totalorder %s31, %s32
      %p43 = scmp.eq.s32.totalorder %s23, 0
      %p44 = por %p42, %p43
      %p45 = scmp.ne.s32.totalorder %s31, %s32
      %p46 = scmp.eq.s32.totalorder %s24, 1
      %p47 = por %p45, %p46
      %p49 = scmp.ne.s32.totalorder %s32, %s48
      %p50 = scmp.eq.s32.totalorder %s24, 0
      %p51 = por %p49, %p50
      %s53 = sadd.s32 %s52, 1
      %p56 = scmp.eq.s32.totalorder %s18, 1
      %p57 = scmp.ne.s32.totalorder %s52, %s54
      %p58 = scmp.eq.s32.totalorder %s18, 0
      %p59 = por %p57, %p58
      %p60 = scmp.ne.s32.totalorder %s52, %s54
      %p61 = scmp.eq.s32.totalorder %s23, 1
      %p62 = por %p60, %p61
      %p63 = scmp.ne.s32.totalorder %s54, %s55
      %p64 = scmp.eq.s32.totalorder %s23, 0
      %p65 = por %p63, %p64
      %p66 = scmp.ne.s32.totalorder %s54, %s55
      %p67 = scmp.eq.s32.totalorder %s24, 1
      %p68 = por %p66, %p67
      %p70 = scmp.ne.s32.totalorder %s55, %s69
      %p71 = scmp.eq.s32.totalorder %s24, 0
      %p72 = por %p70, %p71
      %s74 = sadd.s32 %s73, 1
      %p77 = scmp.eq.s32.totalorder %s18, 1
      %p78 = scmp.ne.s32.totalorder %s73, %s75
      %p79 = scmp.eq.s32.totalorder %s18, 0
      %p80 = por %p78, %p79
      %p81 = scmp.ne.s32.totalorder %s73, %s75
      %p82 = scmp.eq.s32.totalorder %s23, 1
      %p83 = por %p81, %p82
      %p84 = scmp.ne.s32.totalorder %s75, %s76
      %p85 = scmp.eq.s32.totalorder %s23, 0
      %p86 = por %p84, %p85
      %p87 = scmp.ne.s32.totalorder %s75, %s76
      %p88 = scmp.eq.s32.totalorder %s24, 1
      %p89 = por %p87, %p88
      %p91 = scmp.ne.s32.totalorder %s76, %s90
      %p92 = scmp.eq.s32.totalorder %s24, 0
      %p93 = por %p91, %p92
      %s95 = sadd.s32 %s94, 1
      %p98 = scmp.eq.s32.totalorder %s18, 1
      %p99 = scmp.ne.s32.totalorder %s94, %s96
      %p100 = scmp.eq.s32.totalorder %s18, 0
      %p101 = por %p99, %p100
      %p102 = scmp.ne.s32.totalorder %s94, %s96
      %p103 = scmp.eq.s32.totalorder %s23, 1
      %p104 = por %p102, %p103
      %p105 = scmp.ne.s32.totalorder %s96, %s97
      %p106 = scmp.eq.s32.totalorder %s23, 0
      %p107 = por %p105, %p106
      %p108 = scmp.ne.s32.totalorder %s96, %s97
      %p109 = scmp.eq.s32.totalorder %s24, 1
      %p110 = por %p108, %p109
      %p112 = scmp.ne.s32.totalorder %s97, %s111
      %p113 = scmp.eq.s32.totalorder %s24, 0
      %p114 = por %p112, %p113
      %s116 = sadd.s32 %s115, 1
      %p119 = scmp.eq.s32.totalorder %s18, 1
      %p120 = scmp.ne.s32.totalorder %s115, %s117
      %p121 = scmp.eq.s32.totalorder %s18, 0
      %p122 = por %p120, %p121
      %p123 = scmp.ne.s32.totalorder %s115, %s117
      %p124 = scmp.eq.s32.totalorder %s23, 1
      %p125 = por %p123, %p124
      %p126 = scmp.ne.s32.totalorder %s117, %s118
      %p127 = scmp.eq.s32.totalorder %s23, 0
      %p128 = por %p126, %p127
      %p129 = scmp.ne.s32.totalorder %s117, %s118
      %p130 = scmp.eq.s32.totalorder %s24, 1
      %p131 = por %p129, %p130
      %p133 = scmp.ne.s32.totalorder %s118, %s132
      %p134 = scmp.eq.s32.totalorder %s24, 0
      %p135 = por %p133, %p134
      %s137 = sadd.s32 %s136, 1
      %p140 = scmp.eq.s32.totalorder %s18, 1
      %p141 = scmp.ne.s32.totalorder %s136, %s138
      %p142 = scmp.eq.s32.totalorder %s18, 0
      %p143 = por %p141, %p142
      %p144 = scmp.ne.s32.totalorder %s136, %s138
      %p145 = scmp.eq.s32.totalorder %s23, 1
      %p146 = por %p144, %p145
      %p147 = scmp.ne.s32.totalorder %s138, %s139
      %p148 = scmp.eq.s32.totalorder %s23, 0
      %p149 = por %p147, %p148
      %p150 = scmp.ne.s32.totalorder %s138, %s139
      %p151 = scmp.eq.s32.totalorder %s24, 1
      %p152 = por %p150, %p151
      %p154 = scmp.ne.s32.totalorder %s139, %s153
      %p155 = scmp.eq.s32.totalorder %s24, 0
      %p156 = por %p154, %p155
      %s158 = sadd.s32 %s157, 1
      %p161 = scmp.eq.s32.totalorder %s18, 1
      %p162 = scmp.ne.s32.totalorder %s157, %s159
      %p163 = scmp.eq.s32.totalorder %s18, 0
      %p164 = por %p162, %p163
      %p165 = scmp.ne.s32.totalorder %s157, %s159
      %p166 = scmp.eq.s32.totalorder %s23, 1
      %p167 = por %p165, %p166
      %p168 = scmp.ne.s32.totalorder %s159, %s160
      %p169 = scmp.eq.s32.totalorder %s23, 0
      %p170 = por %p168, %p169
      %p171 = scmp.ne.s32.totalorder %s159, %s160
      %p172 = scmp.eq.s32.totalorder %s24, 1
      %p173 = por %p171, %p172
      %p175 = scmp.ne.s32.totalorder %s160, %s174
      %p176 = scmp.eq.s32.totalorder %s24, 0
      %p177 = por %p175, %p176
      %s178 = ssub.s32 %s18, %s25
      %p179 = scmp.eq.s32.totalorder %s178, 0
      %s181 = sadd.s32 %s180, 1
      %s182 = scalar_select %p179, %s180, %s181
      %p185 = pneg %p179
      %p186 = scmp.eq.s32.totalorder %s18, 1
      %p187 = por %p185, %p186
      %p188 = scmp.ne.s32.totalorder %s180, %s183
      %p189 = scmp.eq.s32.totalorder %s18, 0
      %p190 = por %p188, %p189
      %p191 = scmp.ne.s32.totalorder %s180, %s183
      %p192 = scmp.eq.s32.totalorder %s23, 1
      %p193 = por %p191, %p192
      %p194 = scmp.ne.s32.totalorder %s183, %s184
      %p195 = scmp.eq.s32.totalorder %s23, 0
      %p196 = por %p194, %p195
      %p197 = scmp.ne.s32.totalorder %s183, %s184
      %p198 = scmp.eq.s32.totalorder %s24, 1
      %p199 = por %p197, %p198
      %p201 = scmp.ne.s32.totalorder %s184, %s200
      %p202 = scmp.eq.s32.totalorder %s24, 0
      %p203 = por %p201, %p202
      %p204 = scmp.le.s32.totalorder 1, %s18
      %p205 = scmp.lt.s32.totalorder %s18, 3
      %p206 = pnand %p204, %p205
      %p207 = pneg %p206
      // Predicated region
      $region9: #{tpu_custom_call.1} parent=5 // pred_check
        _
      $region10: #{tpu_custom_call.1} parent=5 // pred_check_branch
        %209 = sbr.rel (%p206) target = $region12
      $region11: #{tpu_custom_call.1} parent=5 // pred_region
        %s210 = ssub.s32 %s18, 1
        // Predicated region
        $region13: #{tpu_custom_call.1} parent=11 // pred_check
          %p211 = pneg %p65
        $region14: #{tpu_custom_call.1} parent=11 // pred_check_branch
          %213 = sbr.rel (%p211) target = $region16
        $region15: #{tpu_custom_call.1} parent=11 // pred_region
          _
        $region16: #{tpu_custom_call.1} parent=11 // pred_fallthru
          _
        // Predicated region
        $region17: #{tpu_custom_call.1} parent=11 // pred_check
          %p214 = pneg %p86
        $region18: #{tpu_custom_call.1} parent=11 // pred_check_branch
          %216 = sbr.rel (%p214) target = $region20
        $region19: #{tpu_custom_call.1} parent=11 // pred_region
          _
        $region20: #{tpu_custom_call.1} parent=11 // pred_fallthru
          _
        // Predicated region
        $region21: #{tpu_custom_call.1} parent=11 // pred_check
          %p217 = pneg %p107
        $region22: #{tpu_custom_call.1} parent=11 // pred_check_branch
          %219 = sbr.rel (%p217) target = $region24
        $region23: #{tpu_custom_call.1} parent=11 // pred_region
          _
        $region24: #{tpu_custom_call.1} parent=11 // pred_fallthru
          _
        // Predicated region
        $region25: #{tpu_custom_call.1} parent=11 // pred_check
          %p220 = pneg %p128
        $region26: #{tpu_custom_call.1} parent=11 // pred_check_branch
          %222 = sbr.rel (%p220) target = $region28
        $region27: #{tpu_custom_call.1} parent=11 // pred_region
          _
        $region28: #{tpu_custom_call.1} parent=11 // pred_fallthru
          _
        // Predicated region
        $region29: #{tpu_custom_call.1} parent=11 // pred_check
          %p223 = pneg %p149
        $region30: #{tpu_custom_call.1} parent=11 // pred_check_branch
          %225 = sbr.rel (%p223) target = $region32
        $region31: #{tpu_custom_call.1} parent=11 // pred_region
          _
        $region32: #{tpu_custom_call.1} parent=11 // pred_fallthru
          _
        // Predicated region
        $region33: #{tpu_custom_call.1} parent=11 // pred_check
          %p226 = pneg %p170
        $region34: #{tpu_custom_call.1} parent=11 // pred_check_branch
          %228 = sbr.rel (%p226) target = $region36
        $region35: #{tpu_custom_call.1} parent=11 // pred_region
          _
        $region36: #{tpu_custom_call.1} parent=11 // pred_fallthru
          _
      $region12: #{tpu_custom_call.1} parent=5 // pred_fallthru
        _
      %p229 = scmp.lt.s32.totalorder %s18, 2
      // Predicated region
      $region37: #{tpu_custom_call.1} parent=5 // pred_check
        %p230 = pneg %p229
      $region38: #{tpu_custom_call.1} parent=5 // pred_check_branch
        %232 = sbr.rel (%p230) target = $region40
      $region39: #{tpu_custom_call.1} parent=5 // pred_region
        // Predicated region
        $region41: #{tpu_custom_call.1} parent=39 // pred_check
          %p233 = pneg %p38
        $region42: #{tpu_custom_call.1} parent=39 // pred_check_branch
          %235 = sbr.rel (%p233) target = $region44
        $region43: #{tpu_custom_call.1} parent=39 // pred_region
          %s236 = smul.u32 16, %s18
          %p237 = scmp.lt.s32.totalorder %s236, 31
          %s238 = scalar_select %p237, %s236, 31
          %s239 = smul.addr %s238, 8
          %s240 = scalar_lea.vmem %s0, %s239
          %s241 = smul.u32 16, %s18
        $region44: #{tpu_custom_call.1} parent=39 // pred_fallthru
          _
      $region40: #{tpu_custom_call.1} parent=5 // pred_fallthru
        _
      %p242 = scmp.le.s32.totalorder 1, %s18
      %p243 = scmp.lt.s32.totalorder %s18, 3
      %p244 = pnand %p242, %p243
      %p245 = pneg %p244
      // Predicated region
      $region45: #{tpu_custom_call.1} parent=5 // pred_check
        _
      $region46: #{tpu_custom_call.1} parent=5 // pred_check_branch
        %247 = sbr.rel (%p244) target = $region48
      $region47: #{tpu_custom_call.1} parent=5 // pred_region
        %s248 = ssub.s32 %s18, 1
        %s249 = smul.u32 16, %s23
        %p250 = scmp.lt.s32.totalorder %s249, 31
        %s251 = scalar_select %p250, %s249, 31
        %s252 = smul.addr %s251, 8
        %s253 = scalar_lea.vmem %s0, %s252
        %p254 = pneg %p44
        %p255 = pneg %p41
        %p256 = pneg %p65
        %p257 = pneg %p62
        %p258 = pneg %p86
        %p259 = pneg %p83
        %p260 = pneg %p107
        %p261 = pneg %p104
        %p262 = pneg %p128
        %p263 = pneg %p125
        %p264 = pneg %p149
        %p265 = pneg %p146
        %p266 = pneg %p170
        %p267 = pneg %p167
        %p268 = pneg %p196
        %p269 = pneg %p193
        %s270 = sand.u32 %s183, 1
        %s271 = scalar_lea.sflag [#allocation4], %s270
        %s272 = sand.u32 %s183, 1
        %s273 = scalar_lea.vmem [#allocation3], %s272
        %s274 = smul.u32 16, %s23
        %p275 = scmp.lt.s32.totalorder %s274, 31
        %s276 = scalar_select %p275, %s274, 31
        %s277 = smul.addr %s276, 8
        %s278 = scalar_lea.vmem %s0, %s277
        %s279 = smul.u32 16, %s23
        %v280 = vld [vmem:[%s278] sm:$0xff]
        %v281 = vld [vmem:[%s278 + $0x8] sm:$0xff]
        %v282 = vld [vmem:[%s278 + $0x10] sm:$0xff]
        %v283 = vld [vmem:[%s278 + $0x18] sm:$0xff]
        %v284 = vld [vmem:[%s278 + $0x20] sm:$0xff]
        %v285 = vld [vmem:[%s278 + $0x28] sm:$0xff]
        %v286 = vld [vmem:[%s278 + $0x30] sm:$0xff]
        %v287 = vld [vmem:[%s278 + $0x38] sm:$0xff]
        %v288 = vld [vmem:[%s278 + $0x40] sm:$0xff]
        %v289 = vld [vmem:[%s278 + $0x48] sm:$0xff]
        %v290 = vld [vmem:[%s278 + $0x50] sm:$0xff]
        %v291 = vld [vmem:[%s278 + $0x58] sm:$0xff]
        %v292 = vld [vmem:[%s278 + $0x60] sm:$0xff]
        %v293 = vld [vmem:[%s278 + $0x68] sm:$0xff]
        %v294 = vld [vmem:[%s278 + $0x70] sm:$0xff]
        %v295 = vld [vmem:[%s278 + $0x78] sm:$0xff]
        %v296 = vld [vmem:[%s1] sm:$0xff]
        %v297 = vld [vmem:[%s1 + $0x8] sm:$0xff]
        %v298 = vld [vmem:[%s1 + $0x10] sm:$0xf]
        %v299 = vld [vmem:[%s2] sm:$0xff]
        %v300 = vld [vmem:[%s2 + $0x8] sm:$0xff]
        %v301 = vld [vmem:[%s2 + $0x10] sm:$0xf]
        %303 = vset.pattern.permute.xlu0 0
        %304 = vperm.xlu0 %303, %v299
        %v305 = vpop.permute.xlu0 %304
        %308 = vset.pattern.permute.xlu0 0
        %309 = vperm.xlu0 %308, %v300
        %v310 = vpop.permute.xlu0 %309
        %313 = vset.pattern.permute.xlu0 0
        %314 = vperm.xlu0 %313, %v301
        %v315 = vpop.permute.xlu0 %314
        %vm317 = vcmask 261120
        %v319 = vsel %vm317, %v296, 0
        %v322 = vsel %vm317, %v297, 0
        %v325 = vsel %vm317, %v298, 0
        %v328 = vsel %vm317, %v280, 0
        %v331 = vsel %vm317, %v281, 0
        %v334 = vsel %vm317, %v282, 0
        %v337 = vsel %vm317, %v283, 0
        %v340 = vsel %vm317, %v284, 0
        %v343 = vsel %vm317, %v285, 0
        %v346 = vsel %vm317, %v286, 0
        %v349 = vsel %vm317, %v287, 0
        %v352 = vsel %vm317, %v288, 0
        %v355 = vsel %vm317, %v289, 0
        %v358 = vsel %vm317, %v290, 0
        %v361 = vsel %vm317, %v291, 0
        %v364 = vsel %vm317, %v292, 0
        %v367 = vsel %vm317, %v293, 0
        %v370 = vsel %vm317, %v294, 0
        %v373 = vsel %vm317, %v295, 0
        %375 = vmatprep.subr.mxu0 0.0
        %376 = vmatpush1.xpose.msra.mxu0 %v328
        %377 = vmatprep.subr.mxu0 0.0
        %378 = vmatpush1.xpose.msra.mxu0 %v331
        %379 = vmatprep.subr.mxu0 0.0
        %380 = vmatpush1.xpose.msra.mxu0 %v334
        %381 = vmatprep.subr.mxu0 0.0
        %382 = vmatpush1.xpose.msra.mxu0 %v337
        %383 = vmatprep.subr.mxu0 0.0
        %384 = vmatpush1.xpose.msra.mxu0 %v340
        %385 = vmatprep.subr.mxu0 0.0
        %386 = vmatpush1.xpose.msra.mxu0 %v343
        %387 = vmatprep.subr.mxu0 0.0
        %388 = vmatpush1.xpose.msra.mxu0 %v346
        %389 = vmatprep.subr.mxu0 0.0
        %390 = vmatpush1.xpose.msra.mxu0 %v349
        %391 = vmatprep.subr.mxu0 0.0
        %392 = vmatpush1.xpose.msra.mxu0 %v352
        %393 = vmatprep.subr.mxu0 0.0
        %394 = vmatpush1.xpose.msra.mxu0 %v355
        %395 = vmatprep.subr.mxu0 0.0
        %396 = vmatpush1.xpose.msra.mxu0 %v358
        %397 = vmatprep.subr.mxu0 0.0
        %398 = vmatpush1.xpose.msra.mxu0 %v361
        %399 = vmatprep.subr.mxu0 0.0
        %400 = vmatpush1.xpose.msra.mxu0 %v364
        %401 = vmatprep.subr.mxu0 0.0
        %402 = vmatpush1.xpose.msra.mxu0 %v367
        %403 = vmatprep.subr.mxu0 0.0
        %404 = vmatpush1.xpose.msra.mxu0 %v370
        %405 = vmatprep.subr.mxu0 0.0
        %406 = vmatpush1.xpose.msra.mxu0 %v373
        %407 = vmatprep.subr.mxu0 0.0
        %408 = vmatpush1.xpose.msra.mxu0 0.0
        %409 = vmatprep.subr.mxu0 0.0
        %410 = vmatpush1.xpose.msra.mxu0 0.0
        %411 = vmatprep.subr.mxu0 0.0
        %412 = vmatpush1.xpose.msra.mxu0 0.0
        %413 = vmatprep.subr.mxu0 0.0
        %414 = vmatpush1.xpose.msra.mxu0 0.0
        %415 = vmatprep.subr.mxu0 0.0
        %416 = vmatpush1.xpose.msra.mxu0 0.0
        %417 = vmatprep.subr.mxu0 0.0
        %418 = vmatpush1.xpose.msra.mxu0 0.0
        %419 = vmatprep.subr.mxu0 0.0
        %420 = vmatpush1.xpose.msra.mxu0 0.0
        %421 = vmatprep.subr.mxu0 0.0
        %422 = vmatpush1.xpose.msra.mxu0 0.0
        %423 = vmatprep.subr.mxu0 0.0
        %424 = vmatpush1.xpose.msra.mxu0 0.0
        %425 = vmatprep.subr.mxu0 0.0
        %426 = vmatpush1.xpose.msra.mxu0 0.0
        %427 = vmatprep.subr.mxu0 0.0
        %428 = vmatpush1.xpose.msra.mxu0 0.0
        %429 = vmatprep.subr.mxu0 0.0
        %430 = vmatpush1.xpose.msra.mxu0 0.0
        %431 = vmatprep.subr.mxu0 0.0
        %432 = vmatpush1.xpose.msra.mxu0 0.0
        %433 = vmatprep.subr.mxu0 0.0
        %434 = vmatpush1.xpose.msra.mxu0 0.0
        %435 = vmatprep.subr.mxu0 0.0
        %436 = vmatpush1.xpose.msra.mxu0 0.0
        %437 = vmatprep.subr.mxu0 0.0
        %438 = vmatpush1.xpose.msra.mxu0 0.0
        %439 = vmatprep.mubr.f32.mxu0 0.0
        %440 = vmatmul.mubr.f32.gmra.mrb[0].mxu0 %v319
        %v441 = vpop.f32.mrb[0].mxu0
        %v442 = vadd.f32 %v305, %v441
        %v443 = vpop.f32.mrb[0].mxu0
        %444 = vmatprep.mubr.f32.mxu0 0.0
        %445 = vmatmul.mubr.f32.gmra.mrb[0].mxu0 %v322
        %v446 = vpop.f32.mrb[0].mxu0
        %v447 = vadd.f32 %v310, %v446
        %v448 = vpop.f32.mrb[0].mxu0
        %449 = vmatprep.mubr.f32.mxu0 0.0
        %450 = vmatmul.mubr.f32.gmra.mrb[0].mxu0 %v325
        %v451 = vpop.f32.mrb[0].mxu0
        %v452 = vadd.f32 %v315, %v451
        %v453 = vpop.f32.mrb[0].mxu0
        %454 = vdwg.mxu0
        %v455 = vmax.f32 %v442, 0.0
        %v456 = vmax.f32 %v447, 0.0
        %v457 = vmax.f32 %v452, 0.0
        %v458 = vld [vmem:[%s3] sm:$0x1f]
        %v459 = vld [vmem:[%s4] sm:$0x1f]
        %461 = vset.pattern.permute.xlu0 0
        %462 = vperm.xlu0 %461, %v459
        %v463 = vpop.permute.xlu0 %462
        %vm465 = vcmask 162816
        %v467 = vsel %vm465, %v458, 0
        %vm469 = vcmask 1043456
        %v471 = vsel %vm469, %v457, 0
        %473 = vmatprep.subr.mxu0 0.0
        %474 = vmatpush1.msra.mxu0 %v455
        %475 = vmatprep.subr.mxu0 0.0
        %476 = vmatpush1.msra.mxu0 %v456
        %477 = vmatprep.subr.mxu0 0.0
        %478 = vmatpush1.msra.mxu0 %v471
        %479 = vmatprep.subr.mxu0 0.0
        %480 = vmatpush1.msra.mxu0 0.0
        %481 = vmatprep.subr.mxu0 0.0
        %482 = vmatpush1.msra.mxu0 0.0
        %483 = vmatprep.subr.mxu0 0.0
        %484 = vmatpush1.msra.mxu0 0.0
        %485 = vmatprep.subr.mxu0 0.0
        %486 = vmatpush1.msra.mxu0 0.0
        %487 = vmatprep.subr.mxu0 0.0
        %488 = vmatpush1.msra.mxu0 0.0
        %489 = vmatprep.subr.mxu0 0.0
        %490 = vmatpush1.msra.mxu0 0.0
        %491 = vmatprep.subr.mxu0 0.0
        %492 = vmatpush1.msra.mxu0 0.0
        %493 = vmatprep.subr.mxu0 0.0
        %494 = vmatpush1.msra.mxu0 0.0
        %495 = vmatprep.subr.mxu0 0.0
        %496 = vmatpush1.msra.mxu0 0.0
        %497 = vmatprep.subr.mxu0 0.0
        %498 = vmatpush1.msra.mxu0 0.0
        %499 = vmatprep.subr.mxu0 0.0
        %500 = vmatpush1.msra.mxu0 0.0
        %501 = vmatprep.subr.mxu0 0.0
        %502 = vmatpush1.msra.mxu0 0.0
        %503 = vmatprep.subr.mxu0 0.0
        %504 = vmatpush1.msra.mxu0 0.0
        %505 = vmatprep.subr.mxu0 0.0
        %506 = vmatpush1.msra.mxu0 0.0
        %507 = vmatprep.subr.mxu0 0.0
        %508 = vmatpush1.msra.mxu0 0.0
        %509 = vmatprep.subr.mxu0 0.0
        %510 = vmatpush1.msra.mxu0 0.0
        %511 = vmatprep.subr.mxu0 0.0
        %512 = vmatpush1.msra.mxu0 0.0
        %513 = vmatprep.subr.mxu0 0.0
        %514 = vmatpush1.msra.mxu0 0.0
        %515 = vmatprep.subr.mxu0 0.0
        %516 = vmatpush1.msra.mxu0 0.0
        %517 = vmatprep.subr.mxu0 0.0
        %518 = vmatpush1.msra.mxu0 0.0
        %519 = vmatprep.subr.mxu0 0.0
        %520 = vmatpush1.msra.mxu0 0.0
        %521 = vmatprep.subr.mxu0 0.0
        %522 = vmatpush1.msra.mxu0 0.0
        %523 = vmatprep.subr.mxu0 0.0
        %524 = vmatpush1.msra.mxu0 0.0
        %525 = vmatprep.subr.mxu0 0.0
        %526 = vmatpush1.msra.mxu0 0.0
        %527 = vmatprep.subr.mxu0 0.0
        %528 = vmatpush1.msra.mxu0 0.0
        %529 = vmatprep.subr.mxu0 0.0
        %530 = vmatpush1.msra.mxu0 0.0
        %531 = vmatprep.subr.mxu0 0.0
        %532 = vmatpush1.msra.mxu0 0.0
        %533 = vmatprep.subr.mxu0 0.0
        %534 = vmatpush1.msra.mxu0 0.0
        %535 = vmatprep.subr.mxu0 0.0
        %536 = vmatpush1.msra.mxu0 0.0
        %537 = vmatprep.mubr.f32.mxu0 0.0
        %538 = vmatmul.mubr.f32.gmra.mrb[0].mxu0 %v467
        %v539 = vpop.f32.mrb[0].mxu0
        %v540 = vadd.f32 %v463, %v539
        %v541 = vpop.f32.mrb[0].mxu0
        %542 = vdwg.mxu0
        %v543 = vmax.f32 %v540, 0.0
        %v544 = vld [vmem:[%s5] sm:$0x1]
        %v545 = vld [vmem:[#allocation2] sm:$0x1]
        %547 = vset.pattern.permute.xlu0 0
        %548 = vperm.xlu0 %547, %v545
        %v549 = vpop.permute.xlu0 %548
        %v551 = vlaneseq
        %v552 = vshrl.u32 %v551, 7
        %v553 = vsub.s32 0, %v552
        %v554 = vrot.slane %v549, %v553
        %vm555 = vcmask 39936
        %v557 = vsel %vm555, %v544, 0
        %vm559 = vcmask 1044480
        %v561 = vsel %vm559, %v543, 0
        %563 = vmatprep.subr.mxu0 0.0
        %564 = vmatpush1.msra.mxu0 %v561
        %565 = vmatprep.subr.mxu0 0.0
        %566 = vmatpush1.msra.mxu0 0.0
        %567 = vmatprep.subr.mxu0 0.0
        %568 = vmatpush1.msra.mxu0 0.0
        %569 = vmatprep.subr.mxu0 0.0
        %570 = vmatpush1.msra.mxu0 0.0
        %571 = vmatprep.subr.mxu0 0.0
        %572 = vmatpush1.msra.mxu0 0.0
        %573 = vmatprep.subr.mxu0 0.0
        %574 = vmatpush1.msra.mxu0 0.0
        %575 = vmatprep.subr.mxu0 0.0
        %576 = vmatpush1.msra.mxu0 0.0
        %577 = vmatprep.subr.mxu0 0.0
        %578 = vmatpush1.msra.mxu0 0.0
        %579 = vmatprep.subr.mxu0 0.0
        %580 = vmatpush1.msra.mxu0 0.0
        %581 = vmatprep.subr.mxu0 0.0
        %582 = vmatpush1.msra.mxu0 0.0
        %583 = vmatprep.subr.mxu0 0.0
        %584 = vmatpush1.msra.mxu0 0.0
        %585 = vmatprep.subr.mxu0 0.0
        %586 = vmatpush1.msra.mxu0 0.0
        %587 = vmatprep.subr.mxu0 0.0
        %588 = vmatpush1.msra.mxu0 0.0
        %589 = vmatprep.subr.mxu0 0.0
        %590 = vmatpush1.msra.mxu0 0.0
        %591 = vmatprep.subr.mxu0 0.0
        %592 = vmatpush1.msra.mxu0 0.0
        %593 = vmatprep.subr.mxu0 0.0
        %594 = vmatpush1.msra.mxu0 0.0
        %595 = vmatprep.subr.mxu0 0.0
        %596 = vmatpush1.msra.mxu0 0.0
        %597 = vmatprep.subr.mxu0 0.0
        %598 = vmatpush1.msra.mxu0 0.0
        %599 = vmatprep.subr.mxu0 0.0
        %600 = vmatpush1.msra.mxu0 0.0
        %601 = vmatprep.subr.mxu0 0.0
        %602 = vmatpush1.msra.mxu0 0.0
        %603 = vmatprep.subr.mxu0 0.0
        %604 = vmatpush1.msra.mxu0 0.0
        %605 = vmatprep.subr.mxu0 0.0
        %606 = vmatpush1.msra.mxu0 0.0
        %607 = vmatprep.subr.mxu0 0.0
        %608 = vmatpush1.msra.mxu0 0.0
        %609 = vmatprep.subr.mxu0 0.0
        %610 = vmatpush1.msra.mxu0 0.0
        %611 = vmatprep.subr.mxu0 0.0
        %612 = vmatpush1.msra.mxu0 0.0
        %613 = vmatprep.subr.mxu0 0.0
        %614 = vmatpush1.msra.mxu0 0.0
        %615 = vmatprep.subr.mxu0 0.0
        %616 = vmatpush1.msra.mxu0 0.0
        %617 = vmatprep.subr.mxu0 0.0
        %618 = vmatpush1.msra.mxu0 0.0
        %619 = vmatprep.subr.mxu0 0.0
        %620 = vmatpush1.msra.mxu0 0.0
        %621 = vmatprep.subr.mxu0 0.0
        %622 = vmatpush1.msra.mxu0 0.0
        %623 = vmatprep.subr.mxu0 0.0
        %624 = vmatpush1.msra.mxu0 0.0
        %625 = vmatprep.subr.mxu0 0.0
        %626 = vmatpush1.msra.mxu0 0.0
        %627 = vmatprep.mubr.f32.mxu0 0.0
        %628 = vmatmul.mubr.f32.gmra.mrb[0].mxu0 %v557
        %v629 = vpop.f32.mrb[0].mxu0
        %v630 = vadd.f32 %v554, %v629
        %v631 = vpop.f32.mrb[0].mxu0
        %632 = vdwg.mxu0
        %v633 = vmul.f32 %v630, 0.5
        %v634 = vtanh.pop %v633
        %v635 = vadd.f32 %v634, 1.0
        %v636 = vmul.f32 %v635, 0.5
        %637 = vst [vmem:[%s273] sm:$0x1] %v636
        %s638 = sand.u32 %s183, 1
        %s639 = scalar_lea.sflag [#allocation4], %s638
        %s640 = sand.u32 %s183, 1
        %s641 = scalar_lea.vmem [#allocation3], %s640
        // Predicated region
        $region49: #{tpu_custom_call.1} parent=47 // pred_check
          %p642 = pneg %p193
        $region50: #{tpu_custom_call.1} parent=47 // pred_check_branch
          %644 = sbr.rel (%p642) target = $region52
        $region51: #{tpu_custom_call.1} parent=47 // pred_region
          %s646 = ssub.s32 16, 16
          %647 = vsyncadd %s639, %s646
          %s648 = smul.addr %s23, 16
          %s649 = scalar_lea.hbm %s7, %s648
          %s651 = sshll.u32 %s641, 4
          %s652 = int_to_ptr.vmem [resolvable:$true] %s651
          %654 = dma.vmem_to_hbm [thread:$0]  %s652, 16, %s649, %s639
        $region52: #{tpu_custom_call.1} parent=47 // pred_fallthru
          _
      $region48: #{tpu_custom_call.1} parent=5 // pred_fallthru
        _
      %p655 = scmp.le.s32.totalorder 2, %s18
      // Predicated region
      $region53: #{tpu_custom_call.1} parent=5 // pred_check
        %p656 = pneg %p655
      $region54: #{tpu_custom_call.1} parent=5 // pred_check_branch
        %658 = sbr.rel (%p656) target = $region56
      $region55: #{tpu_custom_call.1} parent=5 // pred_region
        %s659 = ssub.s32 %s18, 2
        // Predicated region
        $region57: #{tpu_custom_call.1} parent=55 // pred_check
          %p660 = pneg %p199
        $region58: #{tpu_custom_call.1} parent=55 // pred_check_branch
          %662 = sbr.rel (%p660) target = $region60
        $region59: #{tpu_custom_call.1} parent=55 // pred_region
          %s663 = sand.u32 %s184, 1
          %s664 = scalar_lea.sflag [#allocation4], %s663
          %s665 = sand.u32 %s184, 1
          %s666 = scalar_lea.vmem [#allocation3], %s665
          %667 = dma.done %s664, 16
        $region60: #{tpu_custom_call.1} parent=55 // pred_fallthru
          _
      $region56: #{tpu_custom_call.1} parent=5 // pred_fallthru
        _
    $region6: #{tpu_custom_call.1} parent=1 // loop_footer
      %s22 = sadd.s32 1, %s18
    $region7: #{tpu_custom_call.1} parent=1 // loop_footer_branch
      %17 = sbr.rel target = $region3
    $region8: #{tpu_custom_call.1} parent=1 // loop_exit
      _
    %668 = vsyncpa [#allocation4], 1
    %s669 = scalar_lea.sflag [#allocation4], 1
    %670 = vsyncpa %s669, 1

</llo_original>
